<compile_context>
chip_gen: v5e
topology: v5e:2x2
jax: 0.10.0
libtpu: 0.0.40
codegen_flags: <defaults>
</compile_context>

<pallas_src>
import jax
import jax.numpy as jnp
from jax.experimental import pallas as pl
from jax.experimental.pallas import tpu as pltpu

DROPOUT_P = 0.3
# keep iff bits >= threshold  =>  P(drop) = threshold / 2^32 = DROPOUT_P
_DROP_THRESHOLD = int(DROPOUT_P * (1 << 32))
_INV_KEEP = 1.0 / (1.0 - DROPOUT_P)


def attn_dropout_kernel(x1_ref, x2_ref, bits_ref, o_ref):
    x1 = x1_ref[...]        # (M, D) f32
    x2 = x2_ref[...]        # (N, D) f32
    bits = bits_ref[...]    # (M, N) uint32 random bits for the dropout mask

    # v1 = x1 @ x2^T.  (scale_factor == 1.0, so no multiply is emitted.)
    # K = D = 16 is heavily padded on the MXU; accepted knowingly since the
    # whole kernel is launch/overhead-bound at these toy shapes.
    s = jax.lax.dot_general(
        x1, x2, (((1,), (1,)), ((), ())),
        preferred_element_type=jnp.float32)                 # (M, N)

    # v3 = softmax(s, -1), numerically stable.  The 1/denom is fused with the
    # inverted-dropout scale 1/(1-p): only one full-tensor multiply remains.
    m = jnp.max(s, axis=-1, keepdims=True)
    e = jnp.exp(s - m)
    denom = jnp.sum(e, axis=-1, keepdims=True)
    inv = pl.reciprocal(denom, approx=False) * jnp.float32(_INV_KEEP)

    # v4 = dropout(v3): integer threshold compare on raw uint32 bits.
    keep = bits >= jnp.uint32(_DROP_THRESHOLD)
    v4 = jnp.where(keep, e * inv, jnp.float32(0.0))         # (M, N)

    # v5 = v4 @ x2 : (M, N) x (N, D) -> (M, D)
    out = jnp.dot(v4, x2, preferred_element_type=jnp.float32)
    o_ref[...] = out.astype(o_ref.dtype)


def model_forward(x1, x2, rng_key):
    B, M, D = x1.shape
    _, N, _ = x2.shape
    # Dropout mask bits drawn with jax.random (distributionally equivalent to
    # torch dropout; not bit-identical to torch's RNG).
    bits = jax.random.bits(rng_key, (B, M, N), dtype=jnp.uint32)
    return pl.pallas_call(
        attn_dropout_kernel,
        out_shape=jax.ShapeDtypeStruct((B, M, D), x1.dtype),
        grid=(B,),
        in_specs=[
            pl.BlockSpec((None, M, D), lambda b: (b, 0, 0)),
            pl.BlockSpec((None, N, D), lambda b: (b, 0, 0)),
            pl.BlockSpec((None, M, N), lambda b: (b, 0, 0)),
        ],
        out_specs=pl.BlockSpec((None, M, D), lambda b: (b, 0, 0)),
        compiler_params=pltpu.CompilerParams(
            dimension_semantics=("parallel",)),
    )(x1, x2, bits)


if __name__ == "__main__":
    key = jax.random.PRNGKey(0)
    k1, k2, k_drop = jax.random.split(key, 3)
    # Shapes implied by the module: x1 (1, 10, 16), x2 (1, 5, 16)
    x1 = jax.random.normal(k1, (1, 10, 16), dtype=jnp.float32)
    x2 = jax.random.normal(k2, (1, 5, 16), dtype=jnp.float32)

    out = model_forward(x1, x2, k_drop)
    jax.block_until_ready(out)
    assert out.shape == (1, 10, 16)
    print("KERNEL_OK")
</pallas_src>

<mosaic_0001>
module attributes {stable_mosaic.version = 11 : i64} {
  func.func @attn_dropout_kernel(%arg0: i32, %arg1: memref<1x10x16xf32, #tpu.memory_space<vmem>>, %arg2: memref<1x5x16xf32, #tpu.memory_space<vmem>>, %arg3: memref<1x10x5xi32, #tpu.memory_space<vmem>>, %arg4: memref<1x10x16xf32, #tpu.memory_space<vmem>>) attributes {dimension_semantics = [#tpu.dimension_semantics<parallel>], iteration_bounds = array<i64: 1>, scalar_prefetch = 0 : i64, scratch_operands = 0 : i64, tpu.core_type = #tpu.core_type<tc>, window_params = [{transform_indices = @transform_0, window_bounds = array<i64: 1, 10, 16>}, {transform_indices = @transform_1, window_bounds = array<i64: 1, 5, 16>}, {transform_indices = @transform_2, window_bounds = array<i64: 1, 10, 5>}, {transform_indices = @transform_3, window_bounds = array<i64: 1, 10, 16>}]} {
    %c0 = arith.constant 0 : index
    %c0_0 = arith.constant 0 : index
    %c0_1 = arith.constant 0 : index
    %0 = vector.load %arg1[%c0, %c0_0, %c0_1] : memref<1x10x16xf32, #tpu.memory_space<vmem>>, vector<1x10x16xf32>
    %1 = vector.shape_cast %0 : vector<1x10x16xf32> to vector<10x16xf32>
    %c0_2 = arith.constant 0 : index
    %c0_3 = arith.constant 0 : index
    %c0_4 = arith.constant 0 : index
    %2 = vector.load %arg2[%c0_2, %c0_3, %c0_4] : memref<1x5x16xf32, #tpu.memory_space<vmem>>, vector<1x5x16xf32>
    %3 = vector.shape_cast %2 : vector<1x5x16xf32> to vector<5x16xf32>
    %c0_5 = arith.constant 0 : index
    %c0_6 = arith.constant 0 : index
    %c0_7 = arith.constant 0 : index
    %4 = vector.load %arg3[%c0_5, %c0_6, %c0_7] : memref<1x10x5xi32, #tpu.memory_space<vmem>>, vector<1x10x5xi32>
    %5 = vector.shape_cast %4 : vector<1x10x5xi32> to vector<10x5xi32>
    %cst = arith.constant dense<0.000000e+00> : vector<10x5xf32>
    %6 = tpu.matmul %1, %3, %cst {dimension_numbers = #tpu.dot_dimension_numbers<[1], [1], [0], [0], [0, 0, 1, 0], [], []>} : vector<10x16xf32>, vector<5x16xf32>, vector<10x5xf32> -> vector<10x5xf32>
    %cst_8 = arith.constant dense<0xFF800000> : vector<10xf32>
    %7 = vector.multi_reduction <maximumf>, %6, %cst_8 [1] : vector<10x5xf32> to vector<10xf32>
    %8 = vector.shape_cast %7 : vector<10xf32> to vector<10x1xf32>
    %9 = vector.broadcast %8 : vector<10x1xf32> to vector<10x5xf32>
    %10 = arith.subf %6, %9 : vector<10x5xf32>
    %11 = math.exp %10 : vector<10x5xf32>
    %cst_9 = arith.constant dense<0.000000e+00> : vector<10xf32>
    %12 = vector.multi_reduction <add>, %11, %cst_9 [1] : vector<10x5xf32> to vector<10xf32>
    %13 = vector.shape_cast %12 : vector<10xf32> to vector<10x1xf32>
    %14 = tpu.reciprocal %13 : vector<10x1xf32> -> vector<10x1xf32>
    %cst_10 = arith.constant 1.42857146 : f32
    %15 = vector.broadcast %cst_10 : f32 to vector<10x1xf32>
    %16 = arith.mulf %14, %15 : vector<10x1xf32>
    %c1288490188_i32 = arith.constant 1288490188 : i32
    %17 = vector.broadcast %c1288490188_i32 : i32 to vector<10x5xi32>
    %18 = arith.cmpi uge, %5, %17 : vector<10x5xi32>
    %19 = vector.broadcast %16 : vector<10x1xf32> to vector<10x5xf32>
    %20 = arith.mulf %11, %19 : vector<10x5xf32>
    %cst_11 = arith.constant 0.000000e+00 : f32
    %21 = vector.broadcast %cst_11 : f32 to vector<10x5xf32>
    %22 = arith.select %18, %20, %21 : vector<10x5xi1>, vector<10x5xf32>
    %cst_12 = arith.constant dense<0.000000e+00> : vector<10x16xf32>
    %23 = tpu.matmul %22, %3, %cst_12 {dimension_numbers = #tpu.dot_dimension_numbers<[1], [0], [0], [1], [0, 0, 1, 1], [], []>} : vector<10x5xf32>, vector<5x16xf32>, vector<10x16xf32> -> vector<10x16xf32>
    %c0_13 = arith.constant 0 : index
    %c0_14 = arith.constant 0 : index
    %c0_15 = arith.constant 0 : index
    %24 = vector.load %arg4[%c0_13, %c0_14, %c0_15] : memref<1x10x16xf32, #tpu.memory_space<vmem>>, vector<1x10x16xf32>
    %25 = vector.shape_cast %24 : vector<1x10x16xf32> to vector<10x16xf32>
    %26 = vector.shape_cast %23 : vector<10x16xf32> to vector<1x10x16xf32>
    tpu.vector_store %arg4[%c0_13, %c0_14, %c0_15], %26 {strides = array<i32>} : memref<1x10x16xf32, #tpu.memory_space<vmem>>, vector<1x10x16xf32>,
    return
  }
  func.func @transform_0(%arg0: i32) -> (i32, i32, i32) {
    %c0_i32 = arith.constant 0 : i32
    %c0_i32_0 = arith.constant 0 : i32
    %c0_i32_1 = arith.constant 0 : i32
    return %arg0, %c0_i32, %c0_i32_0 : i32, i32, i32
  }
  func.func @transform_1(%arg0: i32) -> (i32, i32, i32) {
    %c0_i32 = arith.constant 0 : i32
    %c0_i32_0 = arith.constant 0 : i32
    %c0_i32_1 = arith.constant 0 : i32
    return %arg0, %c0_i32, %c0_i32_0 : i32, i32, i32
  }
  func.func @transform_2(%arg0: i32) -> (i32, i32, i32) {
    %c0_i32 = arith.constant 0 : i32
    %c0_i32_0 = arith.constant 0 : i32
    %c0_i32_1 = arith.constant 0 : i32
    return %arg0, %c0_i32, %c0_i32_0 : i32, i32, i32
  }
  func.func @transform_3(%arg0: i32) -> (i32, i32, i32) {
    %c0_i32 = arith.constant 0 : i32
    %c0_i32_0 = arith.constant 0 : i32
    %c0_i32_1 = arith.constant 0 : i32
    return %arg0, %c0_i32, %c0_i32_0 : i32, i32, i32
  }
}

</mosaic_0001>

<llo_original>
// kernel: tpu_custom_call.1
$region0: #{tpu_custom_call.1}
  #allocation0 [shape = 'u32[]', space=smem, size = 0x4, offset = 0x4, fixed_abs, tag = 'smem constant byte address 0x4 - core index']
  #allocation1 [shape = 'u32[72,128]{1,0:T(1,128)}', space=vmem, size = 0x9000, scoped, tag = 'internal scratch']
  %s0 = inlined_call_operand.vmem [shape: f32[1,10,16], index: 0, kind: input, shape index: {}]
  %s1 = inlined_call_operand.vmem [shape: f32[1,5,16], index: 1, kind: input, shape index: {}]
  %s2 = inlined_call_operand.vmem [shape: u32[1,10,5], index: 2, kind: input, shape index: {}]
  %s3 = inlined_call_operand.vmem [shape: f32[1,10,16], index: 3, kind: output, shape index: {}]
  %s4 = sld [smem:[#allocation0]]
  $region22: #{tpu_custom_call.1} parent=0
    _
  %s6 = ssub.s32 1, %s4
  %s7 = scalar_select 0, %s6, %s4
  // Predicated region
  $region2: #{tpu_custom_call.1} parent=0 // pred_check
    _
  $region3: #{tpu_custom_call.1} parent=0 // pred_check_branch
    %9 = sbr.rel (0) target = $region5
  $region4: #{tpu_custom_call.1} parent=0 // pred_region
    _
  $region5: #{tpu_custom_call.1} parent=0 // pred_fallthru
    _
  // Predicated region
  $region6: #{tpu_custom_call.1} parent=0 // pred_check
    _
  $region7: #{tpu_custom_call.1} parent=0 // pred_check_branch
    %11 = sbr.rel (0) target = $region9
  $region8: #{tpu_custom_call.1} parent=0 // pred_region
    _
  $region9: #{tpu_custom_call.1} parent=0 // pred_fallthru
    _
  // Predicated region
  $region10: #{tpu_custom_call.1} parent=0 // pred_check
    _
  $region11: #{tpu_custom_call.1} parent=0 // pred_check_branch
    %13 = sbr.rel (0) target = $region13
  $region12: #{tpu_custom_call.1} parent=0 // pred_region
    _
  $region13: #{tpu_custom_call.1} parent=0 // pred_fallthru
    _
  %v14 = vld [vmem:[%s0] sm:$0xff]
  %v15 = vld [vmem:[%s0 + $0x8] sm:$0x3]
  %v16 = vld [vmem:[%s1] sm:$0x1f]
  %v17 = vld [vmem:[%s2] sm:$0xff]
  %v18 = vld [vmem:[%s2 + $0x8] sm:$0x3]
  %vm19 = vcmask 130048
  %v21 = vsel %vm19, %v14, 0
  %v24 = vsel %vm19, %v15, 0
  %v27 = vsel %vm19, %v16, 0
  %29 = vmatpush.xpose.msra.mxu0 0.0
  %30 = vmatpush.xpose.msra.mxu0 0.0
  %31 = vmatpush.xpose.msra.mxu0 0.0
  %32 = vmatpush.xpose.msra.mxu0 0.0
  %33 = vmatpush.xpose.msra.mxu0 0.0
  %34 = vmatpush.xpose.msra.mxu0 0.0
  %35 = vmatpush.xpose.msra.mxu0 0.0
  %36 = vmatpush.xpose.msra.mxu0 0.0
  %37 = vmatpush.xpose.msra.mxu0 0.0
  %38 = vmatpush.xpose.msra.mxu0 0.0
  %39 = vmatpush.xpose.msra.mxu0 0.0
  %40 = vmatpush.xpose.msra.mxu0 0.0
  %41 = vmatpush.xpose.msra.mxu0 0.0
  %42 = vmatpush.xpose.msra.mxu0 0.0
  %43 = vmatpush.xpose.msra.mxu0 0.0
  %44 = vmatpush.xpose.msra.mxu0 %v27
  %45 = vmatmul.f32.gmra.mxu0 %v21
  %v46 = vpop.f32.mrf.mxu0
  %v47 = vadd.f32 0.0, %v46
  %48 = vmatmul.f32.gmra.mxu0 %v24
  %v49 = vpop.f32.mrf.mxu0
  %v50 = vadd.f32 0.0, %v49
  %51 = vdwg.mxu0
  %vm52 = vcmask 39936
  %v53 = vsel %vm52, %v47, -inf
  %54 = vmax.xlane.f32.xlu0 %v53
  %v55 = vpop.xlane.xlu0 %54
  %vm56 = vcmask 33792
  %v57 = vsel %vm56, %v50, -inf
  %58 = vmax.xlane.f32.xlu0 %v57
  %v59 = vpop.xlane.xlu0 %58
  %v60 = vsub.f32 %v47, %v55
  %v61 = vsub.f32 %v50, %v59
  %v62 = vmul.f32 %v60, 1.442695
  %v63 = vpow.pop %v62
  %v64 = vmul.f32 %v61, 1.442695
  %v65 = vpow.pop %v64
  %v66 = vsel %vm52, %v63, 0.0
  %67 = vadd.xlane.f32.xlu0 %v66
  %v68 = vpop.xlane.xlu0 %67
  %v69 = vsel %vm56, %v65, 0.0
  %70 = vadd.xlane.f32.xlu0 %v69
  %v71 = vpop.xlane.xlu0 %70
  %v72 = vrcp.pop %v68
  %v73 = vmul.f32 %v68, %v72
  %v74 = vsub.f32 1.0, %v73
  %v75 = vmul.f32 %v72, %v74
  %v76 = vadd.f32 %v72, %v75
  %vm77 = vweird.f32 %v68
  %vm78 = vweird.f32 %v72
  %vm79 = vmor %vm77, %vm78
  %v80 = vsel %vm79, %v72, %v76
  %v81 = vand.u32 2147483647, %v68
  %vm82 = vcmp.eq.f32.partialorder %v81, 8.507059e+37
  %v83 = vand.u32 %v68, 2147483648
  %v84 = vor.u32 1.1754944e-38, %v83
  %v85 = vsel %vm82, %v84, %v80
  %v86 = vrcp.pop %v71
  %v87 = vmul.f32 %v71, %v86
  %v88 = vsub.f32 1.0, %v87
  %v89 = vmul.f32 %v86, %v88
  %v90 = vadd.f32 %v86, %v89
  %vm91 = vweird.f32 %v71
  %vm92 = vweird.f32 %v86
  %vm93 = vmor %vm91, %vm92
  %v94 = vsel %vm93, %v86, %v90
  %v95 = vand.u32 2147483647, %v71
  %vm96 = vcmp.eq.f32.partialorder %v95, 8.507059e+37
  %v97 = vand.u32 %v71, 2147483648
  %v98 = vor.u32 1.1754944e-38, %v97
  %v99 = vsel %vm96, %v98, %v94
  %v100 = vmul.f32 %v85, 1.4285715
  %v101 = vmul.f32 %v99, 1.4285715
  %v102 = vadd.s32 %v17, 2147483648
  %vm104 = vcmp.ge.s32.totalorder %v102, 3435973836
  %v105 = vadd.s32 %v18, 2147483648
  %vm107 = vcmp.ge.s32.totalorder %v105, 3435973836
  %v108 = vmul.f32 %v63, %v100
  %v109 = vmul.f32 %v65, %v101
  %v110 = vsel %vm104, %v108, 0.0
  %v111 = vsel %vm107, %v109, 0.0
  %v113 = vsel %vm52, %v110, 0
  %v116 = vsel %vm52, %v111, 0
  %vm118 = vcmask 1044480
  %v119 = vsel %vm118, %v16, 0
  %121 = vmatpush.msra.mxu0 0.0
  %122 = vmatpush.msra.mxu0 0.0
  %123 = vmatpush.msra.mxu0 0.0
  %124 = vmatpush.msra.mxu0 0.0
  %125 = vmatpush.msra.mxu0 0.0
  %126 = vmatpush.msra.mxu0 0.0
  %127 = vmatpush.msra.mxu0 0.0
  %128 = vmatpush.msra.mxu0 0.0
  %129 = vmatpush.msra.mxu0 0.0
  %130 = vmatpush.msra.mxu0 0.0
  %131 = vmatpush.msra.mxu0 0.0
  %132 = vmatpush.msra.mxu0 0.0
  %133 = vmatpush.msra.mxu0 0.0
  %134 = vmatpush.msra.mxu0 0.0
  %135 = vmatpush.msra.mxu0 0.0
  %136 = vmatpush.msra.mxu0 %v119
  %137 = vmatmul.f32.gmra.mxu0 %v113
  %v138 = vpop.f32.mrf.mxu0
  %v139 = vadd.f32 0.0, %v138
  %140 = vmatmul.f32.gmra.mxu0 %v116
  %v141 = vpop.f32.mrf.mxu0
  %v142 = vadd.f32 0.0, %v141
  %143 = vdwg.mxu0
  %144 = vst.msk [vmem:[%s3] sm:$0xff] %vm19, %v139
  %vm145 = vcmask 123904
  %146 = vst.msk [vmem:[%s3 + $0x8] sm:$0x3] %vm145, %v142
  // Predicated region
  $region14: #{tpu_custom_call.1} parent=0 // pred_check
    _
  $region15: #{tpu_custom_call.1} parent=0 // pred_check_branch
    %148 = sbr.rel (0) target = $region17
  $region16: #{tpu_custom_call.1} parent=0 // pred_region
    _
  $region17: #{tpu_custom_call.1} parent=0 // pred_fallthru
    _
  // Predicated region
  $region18: #{tpu_custom_call.1} parent=0 // pred_check
    _
  $region19: #{tpu_custom_call.1} parent=0 // pred_check_branch
    %150 = sbr.rel (0) target = $region21
  $region20: #{tpu_custom_call.1} parent=0 // pred_region
    _
  $region21: #{tpu_custom_call.1} parent=0 // pred_fallthru
    _

</llo_original>
